<compile_context>
chip_gen: v7x
topology: tpu7x:2x2x1
jax: 0.10.0
libtpu: 0.0.40
codegen_flags: <defaults>
</compile_context>

<pallas_src>
import functools

import jax
import jax.numpy as jnp
from jax.experimental import pallas as pl
from jax.experimental.pallas import tpu as pltpu

# ---- model hyper-parameters (small, synthetic) ----
B, CIN, H, W = 2, 4, 16, 16      # H, W must stay powers of two (mask construction)
CIN_PAD = 8                      # CIN zero-padded to one full sublane-tile
COUT = 8
KH = KW = 3
NUM_CLASSES = 10
HW = H * W                       # 256  (= 2 x 128 lanes, lane-dense)
BHW = B * HW                     # 512  (= 4 x 128 lanes, lane-dense)
K_MERGED = KH * KW * CIN_PAD     # 72   (merged conv contraction dim)


def _conv3x3_relu(x_ref, w_merged_ref, mask_ref):
    """relu(conv3x3(x, pad=1)) with im2col fused in-kernel.

    x_ref        : [CIN_PAD, BHW]    f32 (channels in sublanes, (b,h,w) in lanes,
                                          rows CIN..CIN_PAD-1 are zero)
    w_merged_ref : [COUT, K_MERGED]  f32, w_merged[co, k*CIN_PAD+ci] = w[co,ci,kh,kw]
    mask_ref     : [K_MERGED, BHW]   f32 per-tap boundary-validity mask (precomputed)
    returns      : [COUT, BHW]       f32 lane-dense feature map
    """
    x = x_ref[...]
    taps = []
    for kh in range(KH):
        for kw in range(KW):
            k = kh * KW + kw
            off = (kh - 1) * W + (kw - 1)       # flattened-lane offset of this tap
            if off == 0:
                taps.append(x)                   # center tap: mask is all ones
            else:
                # tap[p] = x[p + off]; lanes that wrap across an image/batch
                # boundary are killed by the precomputed mask (single multiply).
                shifted = pltpu.roll(x, (-off) % BHW, 1)
                taps.append(shifted * mask_ref[k * CIN_PAD:(k + 1) * CIN_PAD, :])
    # Single fat matmul: [COUT, 72] @ [72, B*HW] (default precision = 1 MXU pass,
    # f32 accumulation) instead of nine K=4 matmuls with 9 MXU push/drain cycles.
    taps = jnp.concatenate(taps, axis=0)                         # [72, BHW]
    feat = jnp.dot(w_merged_ref[...], taps,
                   preferred_element_type=jnp.float32)           # [COUT, BHW]
    return jnp.maximum(feat, 0.0)


def _logits_kernel(x_ref, w_merged_ref, mask_ref, w_fc_t_ref, b_fc_ref, logits_t_ref):
    """model(x)[0]: conv+relu -> GAP (lane reduction) -> linear head."""
    feat = _conv3x3_relu(x_ref, w_merged_ref, mask_ref)          # [COUT, BHW]
    # GAP as per-batch lane reductions (XLU slot) instead of a wasteful N=2 matmul.
    col = jax.lax.broadcasted_iota(jnp.int32, (COUT, B), 1)
    pooled = jnp.zeros((COUT, B), dtype=jnp.float32)
    for b in range(B):
        s = jnp.sum(feat[:, b * HW:(b + 1) * HW], axis=1, keepdims=True) * (1.0 / HW)
        pooled = jnp.where(col == b, s, pooled)                  # [COUT, B]
    logits_t_ref[...] = jnp.dot(w_fc_t_ref[...], pooled,         # [NUM_CLASSES, B]
                                preferred_element_type=jnp.float32) + b_fc_ref[...]


def _feat_kernel(x_ref, w_merged_ref, mask_ref, feat_ref):
    """model(x)[1]: feature map, emitted lane-dense as [B*COUT, HW]."""
    feat = _conv3x3_relu(x_ref, w_merged_ref, mask_ref)          # [COUT, BHW]
    for b in range(B):  # 8-aligned sublane / 128-aligned lane slice stores
        feat_ref[b * COUT:(b + 1) * COUT, :] = feat[:, b * HW:(b + 1) * HW]


def _build_tap_mask():
    """[K_MERGED, BHW] f32: 1 where tap (kh,kw) stays inside its own image."""
    lane = jnp.arange(BHW, dtype=jnp.int32)
    col = lane % W
    row = (lane // W) % H
    pieces = []
    for kh in range(KH):
        for kw in range(KW):
            dh, dw = kh - 1, kw - 1
            valid = ((row + dh >= 0) & (row + dh < H) &
                     (col + dw >= 0) & (col + dw < W)).astype(jnp.float32)
            pieces.append(jnp.broadcast_to(valid[None, :], (CIN_PAD, BHW)))
    return jnp.concatenate(pieces, axis=0)  # constant-folded by XLA under jit


@functools.partial(jax.jit, static_argnames=("output_index",))
def gradcam_wrapper_forward(x_nchw, w_conv, w_fc, b_fc, output_index=0):
    """Equivalent of GradCAMWrapper(model, output_index).forward(x)."""
    # Layout plumbing (tiny; allow_input_fusion lets XLA fold it into the call):
    x_cb = jnp.transpose(x_nchw, (1, 0, 2, 3)).reshape(CIN, BHW)
    x_cb = jnp.pad(x_cb, ((0, CIN_PAD - CIN), (0, 0)))                       # [8, BHW]
    w_pad = jnp.pad(w_conv, ((0, 0), (0, CIN_PAD - CIN), (0, 0), (0, 0)))    # [COUT,8,3,3]
    w_merged = jnp.transpose(w_pad, (0, 2, 3, 1)).reshape(COUT, K_MERGED)    # [COUT, 72]
    tap_mask = _build_tap_mask()                                             # [72, BHW]

    def cparams(n_inputs):
        return pltpu.CompilerParams(
            dimension_semantics=("arbitrary",),
            allow_input_fusion=[True] * n_inputs,
        )

    # TODO(synk): on v7x split to grid=(B,) blocks of (CIN_PAD, HW) with
    # dimension_semantics=("parallel",) to occupy the second TensorCore (skip on
    # v5e/v6e: single TC, pure grid overhead), and if B*H*W is ever scaled up,
    # re-derive tile sizes for v7x's 64 MiB VMEM / use pl.Buffered(1) at grid=(1,).

    if output_index == 0:
        w_fc_t = jnp.transpose(w_fc)                              # [NUM_CLASSES, COUT]
        b_fc_col = b_fc.reshape(NUM_CLASSES, 1)
        flops = (2 * COUT * K_MERGED * BHW + COUT * BHW + 2 * NUM_CLASSES * COUT * B)
        bytes_accessed = 4 * (CIN_PAD * BHW + COUT * K_MERGED + K_MERGED * BHW
                              + NUM_CLASSES * COUT + NUM_CLASSES + NUM_CLASSES * B)
        logits_t = pl.pallas_call(
            _logits_kernel,
            out_shape=jax.ShapeDtypeStruct((NUM_CLASSES, B), jnp.float32),
            grid=(1,),
            in_specs=[
                pl.BlockSpec((CIN_PAD, BHW), lambda i: (0, 0)),
                pl.BlockSpec((COUT, K_MERGED), lambda i: (0, 0)),
                pl.BlockSpec((K_MERGED, BHW), lambda i: (0, 0)),
                pl.BlockSpec((NUM_CLASSES, COUT), lambda i: (0, 0)),
                pl.BlockSpec((NUM_CLASSES, 1), lambda i: (0, 0)),
            ],
            out_specs=pl.BlockSpec((NUM_CLASSES, B), lambda i: (0, 0)),
            cost_estimate=pl.CostEstimate(flops=flops, transcendentals=0,
                                          bytes_accessed=bytes_accessed),
            compiler_params=cparams(5),
        )(x_cb, w_merged, tap_mask, w_fc_t, b_fc_col)
        return jnp.transpose(logits_t)                            # [B, NUM_CLASSES]

    if output_index == 1:
        flops = 2 * COUT * K_MERGED * BHW + COUT * BHW
        bytes_accessed = 4 * (CIN_PAD * BHW + COUT * K_MERGED + K_MERGED * BHW
                              + B * COUT * HW)
        feat = pl.pallas_call(
            _feat_kernel,
            out_shape=jax.ShapeDtypeStruct((B * COUT, HW), jnp.float32),
            grid=(1,),
            in_specs=[
                pl.BlockSpec((CIN_PAD, BHW), lambda i: (0, 0)),
                pl.BlockSpec((COUT, K_MERGED), lambda i: (0, 0)),
                pl.BlockSpec((K_MERGED, BHW), lambda i: (0, 0)),
            ],
            out_specs=pl.BlockSpec((B * COUT, HW), lambda i: (0, 0)),
            cost_estimate=pl.CostEstimate(flops=flops, transcendentals=0,
                                          bytes_accessed=bytes_accessed),
            compiler_params=cparams(3),
        )(x_cb, w_merged, tap_mask)
        return feat.reshape(B, COUT, H, W)                        # metadata-only reshape

    raise ValueError(f"output_index must be 0 or 1, got {output_index}")


def _reference_forward(x_nchw, w_conv, w_fc, b_fc, output_index=0):
    """Plain-JAX reference mirroring the PyTorch model + wrapper semantics."""
    conv = jax.lax.conv_general_dilated(
        x_nchw, w_conv, window_strides=(1, 1), padding="SAME",
        dimension_numbers=("NCHW", "OIHW", "NCHW"),
        precision=jax.lax.Precision.HIGHEST)
    feat = jnp.maximum(conv, 0.0)                                 # [B, COUT, H, W]
    pooled = jnp.mean(feat, axis=(2, 3))                          # [B, COUT]
    logits = jnp.dot(pooled, w_fc,
                     precision=jax.lax.Precision.HIGHEST) + b_fc  # [B, NUM_CLASSES]
    return (logits, feat)[output_index]


if __name__ == "__main__":
    key = jax.random.PRNGKey(0)
    kx, kw1, kw2, kb = jax.random.split(key, 4)

    x = jax.random.normal(kx, (B, CIN, H, W), dtype=jnp.float32)
    w_conv = jax.random.normal(kw1, (COUT, CIN, KH, KW), dtype=jnp.float32) * 0.1
    w_fc = jax.random.normal(kw2, (COUT, NUM_CLASSES), dtype=jnp.float32) * 0.1
    b_fc = jax.random.normal(kb, (NUM_CLASSES,), dtype=jnp.float32) * 0.01

    # Kernel runs matmuls at default MXU precision (single bf16 pass, f32 accumulate);
    # reference is full-f32 HIGHEST, so tolerances are bf16-class (~1e-2).
    ATOL = RTOL = 2e-2

    # output_index = 0 -> logits (the GradCAMWrapper default).
    logits = jax.block_until_ready(
        gradcam_wrapper_forward(x, w_conv, w_fc, b_fc, output_index=0))
    logits_ref = _reference_forward(x, w_conv, w_fc, b_fc, output_index=0)
    assert logits.shape == (B, NUM_CLASSES), logits.shape
    assert jnp.allclose(logits, logits_ref, atol=ATOL, rtol=RTOL), "logits mismatch"

    # output_index = 1 -> feature map (what Grad-CAM hooks onto).
    feat = jax.block_until_ready(
        gradcam_wrapper_forward(x, w_conv, w_fc, b_fc, output_index=1))
    feat_ref = _reference_forward(x, w_conv, w_fc, b_fc, output_index=1)
    assert feat.shape == (B, COUT, H, W), feat.shape
    assert jnp.allclose(feat, feat_ref, atol=ATOL, rtol=RTOL), "feature-map mismatch"

    print("KERNEL_OK")
</pallas_src>

<mosaic_0001>
module attributes {stable_mosaic.version = 11 : i64} {
  func.func @_logits_kernel(%arg0: i32, %arg1: memref<8x512xf32, #tpu.memory_space<vmem>>, %arg2: memref<8x72xf32, #tpu.memory_space<vmem>>, %arg3: memref<72x512xf32, #tpu.memory_space<vmem>>, %arg4: memref<10x8xf32, #tpu.memory_space<vmem>>, %arg5: memref<10x1xf32, #tpu.memory_space<vmem>>, %arg6: memref<10x2xf32, #tpu.memory_space<vmem>>) attributes {dimension_semantics = [#tpu.dimension_semantics<arbitrary>], iteration_bounds = array<i64: 1>, scalar_prefetch = 0 : i64, scratch_operands = 0 : i64, tpu.core_type = #tpu.core_type<tc>, window_params = [{pipeline_mode = #tpu.pipeline_mode<synchronous>, transform_indices = @transform_0, window_bounds = array<i64: 8, 512>}, {pipeline_mode = #tpu.pipeline_mode<synchronous>, transform_indices = @transform_1, window_bounds = array<i64: 8, 72>}, {pipeline_mode = #tpu.pipeline_mode<synchronous>, transform_indices = @transform_2, window_bounds = array<i64: 72, 512>}, {pipeline_mode = #tpu.pipeline_mode<synchronous>, transform_indices = @transform_3, window_bounds = array<i64: 10, 8>}, {pipeline_mode = #tpu.pipeline_mode<synchronous>, transform_indices = @transform_4, window_bounds = array<i64: 10, 1>}, {pipeline_mode = #tpu.pipeline_mode<synchronous>, transform_indices = @transform_5, window_bounds = array<i64: 10, 2>}]} {
    %c0 = arith.constant 0 : index
    %c0_0 = arith.constant 0 : index
    %0 = vector.load %arg1[%c0, %c0_0] : memref<8x512xf32, #tpu.memory_space<vmem>>, vector<8x512xf32>
    %c17_i32 = arith.constant 17 : i32
    %1 = tpu.dynamic_rotate %0 by %c17_i32 dim 1 : vector<8x512xf32>, i32 -> vector<8x512xf32>
    %c0_1 = arith.constant 0 : index
    %c0_2 = arith.constant 0 : index
    %2 = vector.load %arg3[%c0_1, %c0_2] : memref<72x512xf32, #tpu.memory_space<vmem>>, vector<8x512xf32>
    %3 = arith.mulf %1, %2 : vector<8x512xf32>
    %c16_i32 = arith.constant 16 : i32
    %4 = tpu.dynamic_rotate %0 by %c16_i32 dim 1 : vector<8x512xf32>, i32 -> vector<8x512xf32>
    %c8 = arith.constant 8 : index
    %c0_3 = arith.constant 0 : index
    %5 = vector.load %arg3[%c8, %c0_3] : memref<72x512xf32, #tpu.memory_space<vmem>>, vector<8x512xf32>
    %6 = arith.mulf %4, %5 : vector<8x512xf32>
    %c15_i32 = arith.constant 15 : i32
    %7 = tpu.dynamic_rotate %0 by %c15_i32 dim 1 : vector<8x512xf32>, i32 -> vector<8x512xf32>
    %c16 = arith.constant 16 : index
    %c0_4 = arith.constant 0 : index
    %8 = vector.load %arg3[%c16, %c0_4] : memref<72x512xf32, #tpu.memory_space<vmem>>, vector<8x512xf32>
    %9 = arith.mulf %7, %8 : vector<8x512xf32>
    %c1_i32 = arith.constant 1 : i32
    %10 = tpu.dynamic_rotate %0 by %c1_i32 dim 1 : vector<8x512xf32>, i32 -> vector<8x512xf32>
    %c24 = arith.constant 24 : index
    %c0_5 = arith.constant 0 : index
    %11 = vector.load %arg3[%c24, %c0_5] : memref<72x512xf32, #tpu.memory_space<vmem>>, vector<8x512xf32>
    %12 = arith.mulf %10, %11 : vector<8x512xf32>
    %c511_i32 = arith.constant 511 : i32
    %13 = tpu.dynamic_rotate %0 by %c511_i32 dim 1 : vector<8x512xf32>, i32 -> vector<8x512xf32>
    %c40 = arith.constant 40 : index
    %c0_6 = arith.constant 0 : index
    %14 = vector.load %arg3[%c40, %c0_6] : memref<72x512xf32, #tpu.memory_space<vmem>>, vector<8x512xf32>
    %15 = arith.mulf %13, %14 : vector<8x512xf32>
    %c497_i32 = arith.constant 497 : i32
    %16 = tpu.dynamic_rotate %0 by %c497_i32 dim 1 : vector<8x512xf32>, i32 -> vector<8x512xf32>
    %c48 = arith.constant 48 : index
    %c0_7 = arith.constant 0 : index
    %17 = vector.load %arg3[%c48, %c0_7] : memref<72x512xf32, #tpu.memory_space<vmem>>, vector<8x512xf32>
    %18 = arith.mulf %16, %17 : vector<8x512xf32>
    %c496_i32 = arith.constant 496 : i32
    %19 = tpu.dynamic_rotate %0 by %c496_i32 dim 1 : vector<8x512xf32>, i32 -> vector<8x512xf32>
    %c56 = arith.constant 56 : index
    %c0_8 = arith.constant 0 : index
    %20 = vector.load %arg3[%c56, %c0_8] : memref<72x512xf32, #tpu.memory_space<vmem>>, vector<8x512xf32>
    %21 = arith.mulf %19, %20 : vector<8x512xf32>
    %c495_i32 = arith.constant 495 : i32
    %22 = tpu.dynamic_rotate %0 by %c495_i32 dim 1 : vector<8x512xf32>, i32 -> vector<8x512xf32>
    %c64 = arith.constant 64 : index
    %c0_9 = arith.constant 0 : index
    %23 = vector.load %arg3[%c64, %c0_9] : memref<72x512xf32, #tpu.memory_space<vmem>>, vector<8x512xf32>
    %24 = arith.mulf %22, %23 : vector<8x512xf32>
    %25 = tpu.concatenate %3, %6, %9, %12, %0, %15, %18, %21, %24 in 0 : vector<8x512xf32>, vector<8x512xf32>, vector<8x512xf32>, vector<8x512xf32>, vector<8x512xf32>, vector<8x512xf32>, vector<8x512xf32>, vector<8x512xf32>, vector<8x512xf32> -> vector<72x512xf32>
    %c0_10 = arith.constant 0 : index
    %c0_11 = arith.constant 0 : index
    %26 = vector.load %arg2[%c0_10, %c0_11] : memref<8x72xf32, #tpu.memory_space<vmem>>, vector<8x72xf32>
    %cst = arith.constant dense<0.000000e+00> : vector<8x512xf32>
    %27 = tpu.matmul %26, %25, %cst {dimension_numbers = #tpu.dot_dimension_numbers<[1], [0], [0], [1], [0, 0, 1, 1], [], []>} : vector<8x72xf32>, vector<72x512xf32>, vector<8x512xf32> -> vector<8x512xf32>
    %cst_12 = arith.constant 0.000000e+00 : f32
    %28 = vector.broadcast %cst_12 : f32 to vector<8x512xf32>
    %29 = arith.maximumf %27, %28 : vector<8x512xf32>
    %30 = tpu.iota {dimensions = array<i32: 1>} : vector<8x2xi32>
    %cst_13 = arith.constant 0.000000e+00 : f32
    %31 = vector.broadcast %cst_13 : f32 to vector<8x2xf32>
    %32 = vector.extract_strided_slice %29 {offsets = [0, 0], sizes = [8, 256], strides = [1, 1]} : vector<8x512xf32> to vector<8x256xf32>
    %cst_14 = arith.constant dense<0.000000e+00> : vector<8xf32>
    %33 = vector.multi_reduction <add>, %32, %cst_14 [1] : vector<8x256xf32> to vector<8xf32>
    %34 = vector.shape_cast %33 : vector<8xf32> to vector<8x1xf32>
    %cst_15 = arith.constant 3.906250e-03 : f32
    %35 = vector.broadcast %cst_15 : f32 to vector<8x1xf32>
    %36 = arith.mulf %34, %35 : vector<8x1xf32>
    %c0_i32 = arith.constant 0 : i32
    %37 = vector.broadcast %c0_i32 : i32 to vector<8x2xi32>
    %38 = arith.cmpi eq, %30, %37 : vector<8x2xi32>
    %39 = vector.shape_cast %36 : vector<8x1xf32> to vector<8x1xf32>
    %40 = vector.broadcast %39 : vector<8x1xf32> to vector<8x2xf32>
    %41 = arith.select %38, %40, %31 : vector<8x2xi1>, vector<8x2xf32>
    %42 = vector.extract_strided_slice %29 {offsets = [0, 256], sizes = [8, 256], strides = [1, 1]} : vector<8x512xf32> to vector<8x256xf32>
    %cst_16 = arith.constant dense<0.000000e+00> : vector<8xf32>
    %43 = vector.multi_reduction <add>, %42, %cst_16 [1] : vector<8x256xf32> to vector<8xf32>
    %44 = vector.shape_cast %43 : vector<8xf32> to vector<8x1xf32>
    %cst_17 = arith.constant 3.906250e-03 : f32
    %45 = vector.broadcast %cst_17 : f32 to vector<8x1xf32>
    %46 = arith.mulf %44, %45 : vector<8x1xf32>
    %c1_i32_18 = arith.constant 1 : i32
    %47 = vector.broadcast %c1_i32_18 : i32 to vector<8x2xi32>
    %48 = arith.cmpi eq, %30, %47 : vector<8x2xi32>
    %49 = vector.shape_cast %46 : vector<8x1xf32> to vector<8x1xf32>
    %50 = vector.broadcast %49 : vector<8x1xf32> to vector<8x2xf32>
    %51 = arith.select %48, %50, %41 : vector<8x2xi1>, vector<8x2xf32>
    %c0_19 = arith.constant 0 : index
    %c0_20 = arith.constant 0 : index
    %52 = vector.load %arg4[%c0_19, %c0_20] : memref<10x8xf32, #tpu.memory_space<vmem>>, vector<10x8xf32>
    %cst_21 = arith.constant dense<0.000000e+00> : vector<10x2xf32>
    %53 = tpu.matmul %52, %51, %cst_21 {dimension_numbers = #tpu.dot_dimension_numbers<[1], [0], [0], [1], [0, 0, 1, 1], [], []>} : vector<10x8xf32>, vector<8x2xf32>, vector<10x2xf32> -> vector<10x2xf32>
    %c0_22 = arith.constant 0 : index
    %c0_23 = arith.constant 0 : index
    %54 = vector.load %arg5[%c0_22, %c0_23] : memref<10x1xf32, #tpu.memory_space<vmem>>, vector<10x1xf32>
    %55 = vector.broadcast %54 : vector<10x1xf32> to vector<10x2xf32>
    %56 = arith.addf %53, %55 : vector<10x2xf32>
    %c0_24 = arith.constant 0 : index
    %c0_25 = arith.constant 0 : index
    %57 = vector.load %arg6[%c0_24, %c0_25] : memref<10x2xf32, #tpu.memory_space<vmem>>, vector<10x2xf32>
    tpu.vector_store %arg6[%c0_24, %c0_25], %56 {strides = array<i32>} : memref<10x2xf32, #tpu.memory_space<vmem>>, vector<10x2xf32>,
    return
  }
  func.func @transform_0(%arg0: i32) -> (i32, i32) {
    %c0_i32 = arith.constant 0 : i32
    %c0_i32_0 = arith.constant 0 : i32
    %c0_i32_1 = arith.constant 0 : i32
    return %c0_i32, %c0_i32_0 : i32, i32
  }
  func.func @transform_1(%arg0: i32) -> (i32, i32) {
    %c0_i32 = arith.constant 0 : i32
    %c0_i32_0 = arith.constant 0 : i32
    %c0_i32_1 = arith.constant 0 : i32
    return %c0_i32, %c0_i32_0 : i32, i32
  }
  func.func @transform_2(%arg0: i32) -> (i32, i32) {
    %c0_i32 = arith.constant 0 : i32
    %c0_i32_0 = arith.constant 0 : i32
    %c0_i32_1 = arith.constant 0 : i32
    return %c0_i32, %c0_i32_0 : i32, i32
  }
  func.func @transform_3(%arg0: i32) -> (i32, i32) {
    %c0_i32 = arith.constant 0 : i32
    %c0_i32_0 = arith.constant 0 : i32
    %c0_i32_1 = arith.constant 0 : i32
    return %c0_i32, %c0_i32_0 : i32, i32
  }
  func.func @transform_4(%arg0: i32) -> (i32, i32) {
    %c0_i32 = arith.constant 0 : i32
    %c0_i32_0 = arith.constant 0 : i32
    %c0_i32_1 = arith.constant 0 : i32
    return %c0_i32, %c0_i32_0 : i32, i32
  }
  func.func @transform_5(%arg0: i32) -> (i32, i32) {
    %c0_i32 = arith.constant 0 : i32
    %c0_i32_0 = arith.constant 0 : i32
    %c0_i32_1 = arith.constant 0 : i32
    return %c0_i32, %c0_i32_0 : i32, i32
  }
}

</mosaic_0001>

<llo_original>
// kernel: gradcam_wrapper_forward.2
$region0: #{gradcam_wrapper_forward.2}
  #allocation0 [shape = 'u32[]', space=smem, size = 0x4, offset = 0x4, fixed_abs, tag = 'smem constant byte address 0x4 - core index']
  #allocation1 [shape = 'u32[144,128]{1,0:T(1,128)}', space=vmem, size = 0x12000, scoped, tag = 'internal scratch']
  #allocation2 [shape = 'u32[2048]{0}', space=vmem, size = 0x2000, scoped, tag = 'scoped memory for gradcam_wrapper_forward.2']
  #allocation3 [shape = 'u32[2048]{0}', space=vmem, size = 0x2000, scoped, tag = 'scoped memory for gradcam_wrapper_forward.2']
  #allocation4 [shape = 'u32[2048]{0}', space=vmem, size = 0x2000, scoped, tag = 'scoped memory for gradcam_wrapper_forward.2']
  #allocation5 [shape = 'u32[2048]{0}', space=vmem, size = 0x2000, scoped, tag = 'scoped memory for gradcam_wrapper_forward.2']
  #allocation6 [shape = 'u32[2048]{0}', space=vmem, size = 0x2000, scoped, tag = 'scoped memory for gradcam_wrapper_forward.2']
  %s0 = inlined_call_operand.vmem [shape: f32[8,72], index: 0, kind: input, shape index: {}]
  %s1 = inlined_call_operand.vmem [shape: f32[72,512], index: 1, kind: input, shape index: {}]
  %s2 = inlined_call_operand.vmem [shape: f32[10,1], index: 2, kind: input, shape index: {}]
  %s3 = inlined_call_operand.vmem [shape: f32[4,512], index: 3, kind: input, shape index: {}]
  %s4 = inlined_call_operand.<no memory space> [shape: f32[], index: 4, kind: input, shape index: {}]
  %s5 = inlined_call_operand.vmem [shape: f32[8,10], index: 5, kind: input, shape index: {}]
  %s6 = inlined_call_operand.vmem [shape: f32[10,2], index: 6, kind: output, shape index: {}]
  %s7 = sld [smem:[#allocation0]]
  $region30: #{gradcam_wrapper_forward.2} parent=0
    _
  %s9 = ssub.s32 1, %s7
  %s10 = scalar_select 0, %s9, %s7
  %v11 = vstv %s4
  $region1: #{gradcam_wrapper_forward.2} parent=0
    #allocation7 [shape = 'u8[16384]{0}', space=vmem, size = 0x4000, dematerialized = true, scoped, tag = 'FusionAdapter Buffer %fusion.1 = f32[8,512]{1,0:T(8,128)} fusion(%param_3.10, %param_4.2), kind=kLoop, calls=%fused_computation.10.clone, metadata={op_name="jit(gradcam_wrapper_forward)/jit(_pad)/pad" stack_frame_id=8}']
    #allocation8 [shape = 'u8[8192]{0}', space=vmem, size = 0x2000, dematerialized = true, scoped, tag = 'FusionAdapter Buffer %fusion.2 = f32[10,8]{1,0:T(8,128)} fusion(%param_5.1), kind=kLoop, calls=%fused_computation.11.clone, metadata={op_name="jit(gradcam_wrapper_forward)/transpose" stack_frame_id=26}']
    // Predicated region
    $region2: #{gradcam_wrapper_forward.2} parent=1 // pred_check
      _
    $region3: #{gradcam_wrapper_forward.2} parent=1 // pred_check_branch
      %13 = sbr.rel (0) target = $region5
    $region4: #{gradcam_wrapper_forward.2} parent=1 // pred_region
      _
    $region5: #{gradcam_wrapper_forward.2} parent=1 // pred_fallthru
      _
    // Predicated region
    $region6: #{gradcam_wrapper_forward.2} parent=1 // pred_check
      _
    $region7: #{gradcam_wrapper_forward.2} parent=1 // pred_check_branch
      %15 = sbr.rel (0) target = $region9
    $region8: #{gradcam_wrapper_forward.2} parent=1 // pred_region
      _
    $region9: #{gradcam_wrapper_forward.2} parent=1 // pred_fallthru
      _
    // Predicated region
    $region10: #{gradcam_wrapper_forward.2} parent=1 // pred_check
      _
    $region11: #{gradcam_wrapper_forward.2} parent=1 // pred_check_branch
      %17 = sbr.rel (0) target = $region13
    $region12: #{gradcam_wrapper_forward.2} parent=1 // pred_region
      _
    $region13: #{gradcam_wrapper_forward.2} parent=1 // pred_fallthru
      _
    // Predicated region
    $region14: #{gradcam_wrapper_forward.2} parent=1 // pred_check
      _
    $region15: #{gradcam_wrapper_forward.2} parent=1 // pred_check_branch
      %19 = sbr.rel (0) target = $region17
    $region16: #{gradcam_wrapper_forward.2} parent=1 // pred_region
      _
    $region17: #{gradcam_wrapper_forward.2} parent=1 // pred_fallthru
      _
    // Predicated region
    $region18: #{gradcam_wrapper_forward.2} parent=1 // pred_check
      _
    $region19: #{gradcam_wrapper_forward.2} parent=1 // pred_check_branch
      %21 = sbr.rel (0) target = $region21
    $region20: #{gradcam_wrapper_forward.2} parent=1 // pred_region
      _
    $region21: #{gradcam_wrapper_forward.2} parent=1 // pred_fallthru
      _
    %v22 = vld [vmem:[%s3] sm:$0xf]
    %v23 = vlaneseq
    %v24 = vshrl.u32 %v23, 7
    %vm26 = vcmp.lt.s32.totalorder %v24, 4
    %v27 = vsel %vm26, %v22, %v11
    %29 = vst [vmem:[#allocation7] sm:$0xff] %v27
    %s30 = scalar_lea.vmem %s3, 4
    %v31 = vld [vmem:[%s30] sm:$0xf]
    %v32 = vlaneseq
    %v33 = vshrl.u32 %v32, 7
    %vm35 = vcmp.lt.s32.totalorder %v33, 4
    %v36 = vsel %vm35, %v31, %v11
    %s37 = scalar_lea.vmem [#allocation7], 8
    %39 = vst [vmem:[%s37] sm:$0xff] %v36
    %s40 = scalar_lea.vmem %s3, 8
    %v41 = vld [vmem:[%s40] sm:$0xf]
    %v42 = vlaneseq
    %v43 = vshrl.u32 %v42, 7
    %vm45 = vcmp.lt.s32.totalorder %v43, 4
    %v46 = vsel %vm45, %v41, %v11
    %s47 = scalar_lea.vmem [#allocation7], 16
    %49 = vst [vmem:[%s47] sm:$0xff] %v46
    %s50 = scalar_lea.vmem %s3, 12
    %v51 = vld [vmem:[%s50] sm:$0xf]
    %v52 = vlaneseq
    %v53 = vshrl.u32 %v52, 7
    %vm55 = vcmp.lt.s32.totalorder %v53, 4
    %v56 = vsel %vm55, %v51, %v11
    %s57 = scalar_lea.vmem [#allocation7], 24
    %59 = vst [vmem:[%s57] sm:$0xff] %v56
    %v60 = vld [vmem:[%s5] sm:$0xff]
    %62 = vst [vmem:[#allocation8] sm:$0xff] %v60
    %s63 = scalar_lea.vmem %s5, 8
    %v64 = vld [vmem:[%s63] sm:$0xff]
    %s65 = scalar_lea.vmem [#allocation8], 8
    %67 = vst [vmem:[%s65] sm:$0xff] %v64
    %v68 = vld [vmem:[#allocation7] sm:$0xff]
    %v69 = vld [vmem:[#allocation7 + $0x8] sm:$0xff]
    %v70 = vld [vmem:[#allocation7 + $0x10] sm:$0xff]
    %v71 = vld [vmem:[#allocation7 + $0x18] sm:$0xff]
    %72 = vrot.lane.b32.xlu0 %v68, 17
    %v73 = vpop.permute.xlu0 %72
    %74 = vrot.lane.b32.xlu0 %v69, 17
    %v75 = vpop.permute.xlu0 %74
    %76 = vrot.lane.b32.xlu0 %v70, 17
    %v77 = vpop.permute.xlu0 %76
    %78 = vrot.lane.b32.xlu0 %v71, 17
    %v79 = vpop.permute.xlu0 %78
    %v80 = vlaneseq
    %v81 = vand.u32 %v80, 127
    %vm82 = vcmp.lt.s32.totalorder %v81, 17
    %v83 = vsel %vm82, %v77, %v79
    %v84 = vsel %vm82, %v75, %v77
    %v85 = vsel %vm82, %v73, %v75
    %v86 = vsel %vm82, %v79, %v73
    %v87 = vld [vmem:[%s1] sm:$0xff]
    %v88 = vld [vmem:[%s1 + $0x8] sm:$0xff]
    %v89 = vld [vmem:[%s1 + $0x10] sm:$0xff]
    %v90 = vld [vmem:[%s1 + $0x18] sm:$0xff]
    %v91 = vmul.f32 %v86, %v87
    %v92 = vmul.f32 %v85, %v88
    %v93 = vmul.f32 %v84, %v89
    %v94 = vmul.f32 %v83, %v90
    %95 = vrot.lane.b32.xlu0 %v68, 16
    %v96 = vpop.permute.xlu0 %95
    %97 = vrot.lane.b32.xlu0 %v69, 16
    %v98 = vpop.permute.xlu0 %97
    %99 = vrot.lane.b32.xlu0 %v70, 16
    %v100 = vpop.permute.xlu0 %99
    %101 = vrot.lane.b32.xlu0 %v71, 16
    %v102 = vpop.permute.xlu0 %101
    %vm103 = vcmp.lt.s32.totalorder %v81, 16
    %v104 = vsel %vm103, %v100, %v102
    %v105 = vsel %vm103, %v98, %v100
    %v106 = vsel %vm103, %v96, %v98
    %v107 = vsel %vm103, %v102, %v96
    %v108 = vld [vmem:[%s1 + $0x20] sm:$0xff]
    %v109 = vld [vmem:[%s1 + $0x28] sm:$0xff]
    %v110 = vld [vmem:[%s1 + $0x30] sm:$0xff]
    %v111 = vld [vmem:[%s1 + $0x38] sm:$0xff]
    %v112 = vmul.f32 %v107, %v108
    %v113 = vmul.f32 %v106, %v109
    %v114 = vmul.f32 %v105, %v110
    %v115 = vmul.f32 %v104, %v111
    %116 = vrot.lane.b32.xlu0 %v68, 15
    %v117 = vpop.permute.xlu0 %116
    %118 = vrot.lane.b32.xlu0 %v69, 15
    %v119 = vpop.permute.xlu0 %118
    %120 = vrot.lane.b32.xlu0 %v70, 15
    %v121 = vpop.permute.xlu0 %120
    %122 = vrot.lane.b32.xlu0 %v71, 15
    %v123 = vpop.permute.xlu0 %122
    %vm124 = vcmp.lt.s32.totalorder %v81, 15
    %v125 = vsel %vm124, %v121, %v123
    %v126 = vsel %vm124, %v119, %v121
    %v127 = vsel %vm124, %v117, %v119
    %v128 = vsel %vm124, %v123, %v117
    %v129 = vld [vmem:[%s1 + $0x40] sm:$0xff]
    %v130 = vld [vmem:[%s1 + $0x48] sm:$0xff]
    %v131 = vld [vmem:[%s1 + $0x50] sm:$0xff]
    %v132 = vld [vmem:[%s1 + $0x58] sm:$0xff]
    %v133 = vmul.f32 %v128, %v129
    %v134 = vmul.f32 %v127, %v130
    %v135 = vmul.f32 %v126, %v131
    %v136 = vmul.f32 %v125, %v132
    %137 = vrot.lane.b32.xlu0 %v68, 1
    %v138 = vpop.permute.xlu0 %137
    %139 = vrot.lane.b32.xlu0 %v69, 1
    %v140 = vpop.permute.xlu0 %139
    %141 = vrot.lane.b32.xlu0 %v70, 1
    %v142 = vpop.permute.xlu0 %141
    %143 = vrot.lane.b32.xlu0 %v71, 1
    %v144 = vpop.permute.xlu0 %143
    %vm145 = vcmp.lt.s32.totalorder %v81, 1
    %v146 = vsel %vm145, %v142, %v144
    %v147 = vsel %vm145, %v140, %v142
    %v148 = vsel %vm145, %v138, %v140
    %v149 = vsel %vm145, %v144, %v138
    %v150 = vld [vmem:[%s1 + $0x60] sm:$0xff]
    %v151 = vld [vmem:[%s1 + $0x68] sm:$0xff]
    %v152 = vld [vmem:[%s1 + $0x70] sm:$0xff]
    %v153 = vld [vmem:[%s1 + $0x78] sm:$0xff]
    %v154 = vmul.f32 %v149, %v150
    %v155 = vmul.f32 %v148, %v151
    %v156 = vmul.f32 %v147, %v152
    %v157 = vmul.f32 %v146, %v153
    %158 = vrot.lane.b32.xlu0 %v68, 127
    %v159 = vpop.permute.xlu0 %158
    %160 = vrot.lane.b32.xlu0 %v69, 127
    %v161 = vpop.permute.xlu0 %160
    %162 = vrot.lane.b32.xlu0 %v70, 127
    %v163 = vpop.permute.xlu0 %162
    %164 = vrot.lane.b32.xlu0 %v71, 127
    %v165 = vpop.permute.xlu0 %164
    %vm166 = vcmp.lt.s32.totalorder %v81, 127
    %v167 = vsel %vm166, %v163, %v165
    %v168 = vsel %vm166, %v161, %v163
    %v169 = vsel %vm166, %v159, %v161
    %v170 = vsel %vm166, %v165, %v159
    %v171 = vld [vmem:[%s1 + $0xa0] sm:$0xff]
    %v172 = vld [vmem:[%s1 + $0xa8] sm:$0xff]
    %v173 = vld [vmem:[%s1 + $0xb0] sm:$0xff]
    %v174 = vld [vmem:[%s1 + $0xb8] sm:$0xff]
    %v175 = vmul.f32 %v169, %v171
    %v176 = vmul.f32 %v168, %v172
    %v177 = vmul.f32 %v167, %v173
    %v178 = vmul.f32 %v170, %v174
    %179 = vrot.lane.b32.xlu0 %v68, 113
    %v180 = vpop.permute.xlu0 %179
    %181 = vrot.lane.b32.xlu0 %v69, 113
    %v182 = vpop.permute.xlu0 %181
    %183 = vrot.lane.b32.xlu0 %v70, 113
    %v184 = vpop.permute.xlu0 %183
    %185 = vrot.lane.b32.xlu0 %v71, 113
    %v186 = vpop.permute.xlu0 %185
    %vm187 = vcmp.lt.s32.totalorder %v81, 113
    %v188 = vsel %vm187, %v184, %v186
    %v189 = vsel %vm187, %v182, %v184
    %v190 = vsel %vm187, %v180, %v182
    %v191 = vsel %vm187, %v186, %v180
    %v192 = vld [vmem:[%s1 + $0xc0] sm:$0xff]
    %v193 = vld [vmem:[%s1 + $0xc8] sm:$0xff]
    %v194 = vld [vmem:[%s1 + $0xd0] sm:$0xff]
    %v195 = vld [vmem:[%s1 + $0xd8] sm:$0xff]
    %v196 = vmul.f32 %v190, %v192
    %v197 = vmul.f32 %v189, %v193
    %v198 = vmul.f32 %v188, %v194
    %v199 = vmul.f32 %v191, %v195
    %200 = vrot.lane.b32.xlu0 %v68, 112
    %v201 = vpop.permute.xlu0 %200
    %202 = vrot.lane.b32.xlu0 %v69, 112
    %v203 = vpop.permute.xlu0 %202
    %204 = vrot.lane.b32.xlu0 %v70, 112
    %v205 = vpop.permute.xlu0 %204
    %206 = vrot.lane.b32.xlu0 %v71, 112
    %v207 = vpop.permute.xlu0 %206
    %vm208 = vcmp.lt.s32.totalorder %v81, 112
    %v209 = vsel %vm208, %v205, %v207
    %v210 = vsel %vm208, %v203, %v205
    %v211 = vsel %vm208, %v201, %v203
    %v212 = vsel %vm208, %v207, %v201
    %v213 = vld [vmem:[%s1 + $0xe0] sm:$0xff]
    %v214 = vld [vmem:[%s1 + $0xe8] sm:$0xff]
    %v215 = vld [vmem:[%s1 + $0xf0] sm:$0xff]
    %v216 = vld [vmem:[%s1 + $0xf8] sm:$0xff]
    %v217 = vmul.f32 %v211, %v213
    %v218 = vmul.f32 %v210, %v214
    %v219 = vmul.f32 %v209, %v215
    %v220 = vmul.f32 %v212, %v216
    %221 = vrot.lane.b32.xlu0 %v68, 111
    %v222 = vpop.permute.xlu0 %221
    %223 = vrot.lane.b32.xlu0 %v69, 111
    %v224 = vpop.permute.xlu0 %223
    %225 = vrot.lane.b32.xlu0 %v70, 111
    %v226 = vpop.permute.xlu0 %225
    %227 = vrot.lane.b32.xlu0 %v71, 111
    %v228 = vpop.permute.xlu0 %227
    %vm229 = vcmp.lt.s32.totalorder %v81, 111
    %v230 = vsel %vm229, %v226, %v228
    %v231 = vsel %vm229, %v224, %v226
    %v232 = vsel %vm229, %v222, %v224
    %v233 = vsel %vm229, %v228, %v222
    %v234 = vld [vmem:[%s1 + $0x100] sm:$0xff]
    %v235 = vld [vmem:[%s1 + $0x108] sm:$0xff]
    %v236 = vld [vmem:[%s1 + $0x110] sm:$0xff]
    %v237 = vld [vmem:[%s1 + $0x118] sm:$0xff]
    %v238 = vmul.f32 %v232, %v234
    %v239 = vmul.f32 %v231, %v235
    %v240 = vmul.f32 %v230, %v236
    %v241 = vmul.f32 %v233, %v237
    %v242 = vld [vmem:[%s0] sm:$0xff]
    %vm243 = vcmask 588800
    %v245 = vsel %vm243, %v242, 0
    %247 = vmatprep.subr.mxu0 %v92
    %248 = vmatpush1.msra.mxu0 %v91
    %249 = vmatprep.subr.mxu0 %v113
    %250 = vmatpush1.msra.mxu0 %v112
    %251 = vmatprep.subr.mxu0 %v134
    %252 = vmatpush1.msra.mxu0 %v133
    %253 = vmatprep.subr.mxu0 %v155
    %254 = vmatpush1.msra.mxu0 %v154
    %255 = vmatprep.subr.mxu0 %v69
    %256 = vmatpush1.msra.mxu0 %v68
    %257 = vmatprep.subr.mxu0 %v176
    %258 = vmatpush1.msra.mxu0 %v175
    %259 = vmatprep.subr.mxu0 %v197
    %260 = vmatpush1.msra.mxu0 %v196
    %261 = vmatprep.subr.mxu0 %v218
    %262 = vmatpush1.msra.mxu0 %v217
    %263 = vmatprep.subr.mxu0 %v239
    %264 = vmatpush1.msra.mxu0 %v238
    %265 = vmatprep.subr.mxu0 0.0
    %266 = vmatpush1.msra.mxu0 0.0
    %267 = vmatprep.subr.mxu0 0.0
    %268 = vmatpush1.msra.mxu0 0.0
    %269 = vmatprep.subr.mxu0 0.0
    %270 = vmatpush1.msra.mxu0 0.0
    %271 = vmatprep.subr.mxu0 0.0
    %272 = vmatpush1.msra.mxu0 0.0
    %273 = vmatprep.subr.mxu0 0.0
    %274 = vmatpush1.msra.mxu0 0.0
    %275 = vmatprep.subr.mxu0 0.0
    %276 = vmatpush1.msra.mxu0 0.0
    %277 = vmatprep.subr.mxu0 0.0
    %278 = vmatpush1.msra.mxu0 0.0
    %279 = vmatprep.subr.mxu0 0.0
    %280 = vmatpush1.msra.mxu0 0.0
    %281 = vmatprep.subr.mxu0 0.0
    %282 = vmatpush1.msra.mxu0 0.0
    %283 = vmatprep.subr.mxu0 0.0
    %284 = vmatpush1.msra.mxu0 0.0
    %285 = vmatprep.subr.mxu0 0.0
    %286 = vmatpush1.msra.mxu0 0.0
    %287 = vmatprep.subr.mxu0 0.0
    %288 = vmatpush1.msra.mxu0 0.0
    %289 = vmatprep.subr.mxu0 0.0
    %290 = vmatpush1.msra.mxu0 0.0
    %291 = vmatprep.subr.mxu0 0.0
    %292 = vmatpush1.msra.mxu0 0.0
    %293 = vmatprep.subr.mxu0 0.0
    %294 = vmatpush1.msra.mxu0 0.0
    %295 = vmatprep.subr.mxu0 0.0
    %296 = vmatpush1.msra.mxu0 0.0
    %297 = vmatprep.subr.mxu0 0.0
    %298 = vmatpush1.msra.mxu0 0.0
    %299 = vmatprep.subr.mxu0 0.0
    %300 = vmatpush1.msra.mxu0 0.0
    %301 = vmatprep.subr.mxu0 0.0
    %302 = vmatpush1.msra.mxu0 0.0
    %303 = vmatprep.subr.mxu0 0.0
    %304 = vmatpush1.msra.mxu0 0.0
    %305 = vmatprep.subr.mxu0 0.0
    %306 = vmatpush1.msra.mxu0 0.0
    %307 = vmatprep.subr.mxu0 0.0
    %308 = vmatpush1.msra.mxu0 0.0
    %309 = vmatprep.subr.mxu0 0.0
    %310 = vmatpush1.msra.mxu0 0.0
    %311 = vmatprep.mubr.f32.mxu0 0.0
    %312 = vmatmul.mubr.f32.gmra.mrb[0].mxu0 %v245
    %v313 = vpop.f32.mrb[0].mxu0
    %v314 = vadd.f32 0.0, %v313
    %v315 = vpop.f32.mrb[0].mxu0
    %v316 = vadd.f32 0.0, %v315
    %317 = vdwg.mxu0
    %318 = vmatprep.subr.mxu0 %v94
    %319 = vmatpush1.msra.mxu0 %v93
    %320 = vmatprep.subr.mxu0 %v115
    %321 = vmatpush1.msra.mxu0 %v114
    %322 = vmatprep.subr.mxu0 %v136
    %323 = vmatpush1.msra.mxu0 %v135
    %324 = vmatprep.subr.mxu0 %v157
    %325 = vmatpush1.msra.mxu0 %v156
    %326 = vmatprep.subr.mxu0 %v71
    %327 = vmatpush1.msra.mxu0 %v70
    %328 = vmatprep.subr.mxu0 %v178
    %329 = vmatpush1.msra.mxu0 %v177
    %330 = vmatprep.subr.mxu0 %v199
    %331 = vmatpush1.msra.mxu0 %v198
    %332 = vmatprep.subr.mxu0 %v220
    %333 = vmatpush1.msra.mxu0 %v219
    %334 = vmatprep.subr.mxu0 %v241
    %335 = vmatpush1.msra.mxu0 %v240
    %336 = vmatprep.subr.mxu0 0.0
    %337 = vmatpush1.msra.mxu0 0.0
    %338 = vmatprep.subr.mxu0 0.0
    %339 = vmatpush1.msra.mxu0 0.0
    %340 = vmatprep.subr.mxu0 0.0
    %341 = vmatpush1.msra.mxu0 0.0
    %342 = vmatprep.subr.mxu0 0.0
    %343 = vmatpush1.msra.mxu0 0.0
    %344 = vmatprep.subr.mxu0 0.0
    %345 = vmatpush1.msra.mxu0 0.0
    %346 = vmatprep.subr.mxu0 0.0
    %347 = vmatpush1.msra.mxu0 0.0
    %348 = vmatprep.subr.mxu0 0.0
    %349 = vmatpush1.msra.mxu0 0.0
    %350 = vmatprep.subr.mxu0 0.0
    %351 = vmatpush1.msra.mxu0 0.0
    %352 = vmatprep.subr.mxu0 0.0
    %353 = vmatpush1.msra.mxu0 0.0
    %354 = vmatprep.subr.mxu0 0.0
    %355 = vmatpush1.msra.mxu0 0.0
    %356 = vmatprep.subr.mxu0 0.0
    %357 = vmatpush1.msra.mxu0 0.0
    %358 = vmatprep.subr.mxu0 0.0
    %359 = vmatpush1.msra.mxu0 0.0
    %360 = vmatprep.subr.mxu0 0.0
    %361 = vmatpush1.msra.mxu0 0.0
    %362 = vmatprep.subr.mxu0 0.0
    %363 = vmatpush1.msra.mxu0 0.0
    %364 = vmatprep.subr.mxu0 0.0
    %365 = vmatpush1.msra.mxu0 0.0
    %366 = vmatprep.subr.mxu0 0.0
    %367 = vmatpush1.msra.mxu0 0.0
    %368 = vmatprep.subr.mxu0 0.0
    %369 = vmatpush1.msra.mxu0 0.0
    %370 = vmatprep.subr.mxu0 0.0
    %371 = vmatpush1.msra.mxu0 0.0
    %372 = vmatprep.subr.mxu0 0.0
    %373 = vmatpush1.msra.mxu0 0.0
    %374 = vmatprep.subr.mxu0 0.0
    %375 = vmatpush1.msra.mxu0 0.0
    %376 = vmatprep.subr.mxu0 0.0
    %377 = vmatpush1.msra.mxu0 0.0
    %378 = vmatprep.subr.mxu0 0.0
    %379 = vmatpush1.msra.mxu0 0.0
    %380 = vmatprep.subr.mxu0 0.0
    %381 = vmatpush1.msra.mxu0 0.0
    %382 = vmatprep.mubr.f32.mxu0 0.0
    %383 = vmatmul.mubr.f32.gmra.mrb[0].mxu0 %v245
    %v384 = vpop.f32.mrb[0].mxu0
    %v385 = vadd.f32 0.0, %v384
    %v386 = vpop.f32.mrb[0].mxu0
    %v387 = vadd.f32 0.0, %v386
    %388 = vdwg.mxu0
    %v389 = vmax.f32 %v314, 0.0
    %v390 = vmax.f32 %v316, 0.0
    %v391 = vmax.f32 %v385, 0.0
    %v392 = vmax.f32 %v387, 0.0
    %v393 = vadd.f32 %v389, %v390
    %394 = vadd.xlane.f32.xlu0 %v393
    %v395 = vpop.xlane.xlu0 %394
    %v396 = vmul.f32 %v395, 0.00390625
    %vm397 = vcmp.eq.s32.totalorder %v81, 0
    %v398 = vsel %vm397, %v396, 0.0
    %v399 = vadd.f32 %v391, %v392
    %400 = vadd.xlane.f32.xlu0 %v399
    %v401 = vpop.xlane.xlu0 %400
    %v402 = vmul.f32 %v401, 0.00390625
    %vm403 = vcmp.eq.s32.totalorder %v81, 1
    %v404 = vsel %vm403, %v402, %v398
    %v405 = vld [vmem:[#allocation8] sm:$0xff]
    %v406 = vld [vmem:[#allocation8 + $0x8] sm:$0x3]
    %v407 = vld [vmem:[%s2] sm:$0xff]
    %v408 = vld [vmem:[%s2 + $0x8] sm:$0x3]
    %410 = vset.pattern.permute.xlu0 0
    %411 = vperm.xlu0 %410, %v407
    %v412 = vpop.permute.xlu0 %411
    %415 = vset.pattern.permute.xlu0 0
    %416 = vperm.xlu0 %415, %v408
    %v417 = vpop.permute.xlu0 %416
    %vm419 = vcmask 64512
    %v421 = vsel %vm419, %v405, 0
    %v424 = vsel %vm419, %v406, 0
    %426 = vmatprep.subr.mxu0 0.0
    %427 = vmatpush1.msra.mxu0 %v404
    %428 = vmatprep.subr.mxu0 0.0
    %429 = vmatpush1.msra.mxu0 0.0
    %430 = vmatprep.subr.mxu0 0.0
    %431 = vmatpush1.msra.mxu0 0.0
    %432 = vmatprep.subr.mxu0 0.0
    %433 = vmatpush1.msra.mxu0 0.0
    %434 = vmatprep.subr.mxu0 0.0
    %435 = vmatpush1.msra.mxu0 0.0
    %436 = vmatprep.subr.mxu0 0.0
    %437 = vmatpush1.msra.mxu0 0.0
    %438 = vmatprep.subr.mxu0 0.0
    %439 = vmatpush1.msra.mxu0 0.0
    %440 = vmatprep.subr.mxu0 0.0
    %441 = vmatpush1.msra.mxu0 0.0
    %442 = vmatprep.subr.mxu0 0.0
    %443 = vmatpush1.msra.mxu0 0.0
    %444 = vmatprep.subr.mxu0 0.0
    %445 = vmatpush1.msra.mxu0 0.0
    %446 = vmatprep.subr.mxu0 0.0
    %447 = vmatpush1.msra.mxu0 0.0
    %448 = vmatprep.subr.mxu0 0.0
    %449 = vmatpush1.msra.mxu0 0.0
    %450 = vmatprep.subr.mxu0 0.0
    %451 = vmatpush1.msra.mxu0 0.0
    %452 = vmatprep.subr.mxu0 0.0
    %453 = vmatpush1.msra.mxu0 0.0
    %454 = vmatprep.subr.mxu0 0.0
    %455 = vmatpush1.msra.mxu0 0.0
    %456 = vmatprep.subr.mxu0 0.0
    %457 = vmatpush1.msra.mxu0 0.0
    %458 = vmatprep.subr.mxu0 0.0
    %459 = vmatpush1.msra.mxu0 0.0
    %460 = vmatprep.subr.mxu0 0.0
    %461 = vmatpush1.msra.mxu0 0.0
    %462 = vmatprep.subr.mxu0 0.0
    %463 = vmatpush1.msra.mxu0 0.0
    %464 = vmatprep.subr.mxu0 0.0
    %465 = vmatpush1.msra.mxu0 0.0
    %466 = vmatprep.subr.mxu0 0.0
    %467 = vmatpush1.msra.mxu0 0.0
    %468 = vmatprep.subr.mxu0 0.0
    %469 = vmatpush1.msra.mxu0 0.0
    %470 = vmatprep.subr.mxu0 0.0
    %471 = vmatpush1.msra.mxu0 0.0
    %472 = vmatprep.subr.mxu0 0.0
    %473 = vmatpush1.msra.mxu0 0.0
    %474 = vmatprep.subr.mxu0 0.0
    %475 = vmatpush1.msra.mxu0 0.0
    %476 = vmatprep.subr.mxu0 0.0
    %477 = vmatpush1.msra.mxu0 0.0
    %478 = vmatprep.subr.mxu0 0.0
    %479 = vmatpush1.msra.mxu0 0.0
    %480 = vmatprep.subr.mxu0 0.0
    %481 = vmatpush1.msra.mxu0 0.0
    %482 = vmatprep.subr.mxu0 0.0
    %483 = vmatpush1.msra.mxu0 0.0
    %484 = vmatprep.subr.mxu0 0.0
    %485 = vmatpush1.msra.mxu0 0.0
    %486 = vmatprep.subr.mxu0 0.0
    %487 = vmatpush1.msra.mxu0 0.0
    %488 = vmatprep.subr.mxu0 0.0
    %489 = vmatpush1.msra.mxu0 0.0
    %490 = vmatprep.mubr.f32.mxu0 0.0
    %491 = vmatmul.mubr.f32.gmra.mrb[0].mxu0 %v421
    %v492 = vpop.f32.mrb[0].mxu0
    %v493 = vadd.f32 %v412, %v492
    %v494 = vpop.f32.mrb[0].mxu0
    %495 = vmatprep.mubr.f32.mxu0 0.0
    %496 = vmatmul.mubr.f32.gmra.mrb[0].mxu0 %v424
    %v497 = vpop.f32.mrb[0].mxu0
    %v498 = vadd.f32 %v417, %v497
    %v499 = vpop.f32.mrb[0].mxu0
    %500 = vdwg.mxu0
    %vm501 = vcmask 15360
    %502 = vst.msk [vmem:[%s6] sm:$0xff] %vm501, %v493
    %vm503 = vcmask 9216
    %504 = vst.msk [vmem:[%s6 + $0x8] sm:$0x3] %vm503, %v498
    // Predicated region
    $region22: #{gradcam_wrapper_forward.2} parent=1 // pred_check
      _
    $region23: #{gradcam_wrapper_forward.2} parent=1 // pred_check_branch
      %506 = sbr.rel (0) target = $region25
    $region24: #{gradcam_wrapper_forward.2} parent=1 // pred_region
      _
    $region25: #{gradcam_wrapper_forward.2} parent=1 // pred_fallthru
      _
    // Predicated region
    $region26: #{gradcam_wrapper_forward.2} parent=1 // pred_check
      _
    $region27: #{gradcam_wrapper_forward.2} parent=1 // pred_check_branch
      %508 = sbr.rel (0) target = $region29
    $region28: #{gradcam_wrapper_forward.2} parent=1 // pred_region
      _
    $region29: #{gradcam_wrapper_forward.2} parent=1 // pred_fallthru
      _

</llo_original>
